<compile_context>
chip_gen: v7x
topology: tpu7x:2x2x1
jax: 0.10.0
libtpu: 0.0.40
codegen_flags: <defaults>
</compile_context>

<pallas_src>
import functools

import jax
import jax.numpy as jnp
from jax import lax
from jax.experimental import pallas as pl
from jax.experimental.pallas import tpu as pltpu

IN_FEATURES = 300
OUT_FEATURES = 4


def _round_up(n, m):
    return ((n + m - 1) // m) * m


def linear_softmax_kernel(x_ref, wt_ref, o_ref):
    # x_ref: [TB, IN]   wt_ref: [IN, OUT]   o_ref: [TB, OUT]
    logits = lax.dot_general(
        x_ref[...],
        wt_ref[...],
        dimension_numbers=(((1,), (0,)), ((), ())),   # [TB,IN] @ [IN,OUT]
        preferred_element_type=jnp.float32,
        precision=lax.Precision.HIGHEST,              # fp32-accurate contract
    )  # [TB, OUT] f32
    # Numerically stable softmax over OUT (last) axis == PyTorch dim=1.
    m = jnp.max(logits, axis=-1, keepdims=True)
    e = jnp.exp(logits - m)
    denom = jnp.sum(e, axis=-1, keepdims=True)
    # Exact divide (kernel is HBM-bound; approx reciprocal cost savings are
    # irrelevant and it was the source of the previous >1e-3 error).
    o_ref[...] = (e / denom).astype(o_ref.dtype)


@functools.partial(jax.jit, static_argnames=("block_b",))
def linear_softmax(x, w, *, block_b=2048):
    """x: [B, 300], w: [4, 300] (native nn.Linear layout). Returns [B, 4] f32."""
    B = x.shape[0]
    wt = w.T  # [IN, OUT] = [300, 4]; tiny one-time transpose (4.8 KB).

    # Batch tile: multiple of 8 (f32 sublane), large by default to amortize
    # per-step overhead; for big B keep >= 4 grid steps so v7x's 2 TensorCores
    # each get >= 2 iterations to double-buffer their stream.
    TB = min(block_b, _round_up(B, 8))
    if B >= 4 * 1024:
        TB = min(TB, _round_up(pl.cdiv(B, 4), 8))
    TB = max(8, _round_up(TB, 8))

    # No jnp.pad (that would re-copy all of x in HBM). The last (partial) tile
    # reads unspecified values in its out-of-range rows; softmax is row-wise
    # independent and the out-of-range output rows are masked on store, so
    # nothing invalid escapes.
    grid = (pl.cdiv(B, TB),)

    bytes_x = B * IN_FEATURES * x.dtype.itemsize
    bytes_w = IN_FEATURES * OUT_FEATURES * w.dtype.itemsize
    bytes_o = B * OUT_FEATURES * 4

    out = pl.pallas_call(
        linear_softmax_kernel,
        out_shape=jax.ShapeDtypeStruct((B, OUT_FEATURES), jnp.float32),
        grid=grid,
        in_specs=[
            # x: one batch tile per grid step -> pipelined HBM streaming.
            pl.BlockSpec((TB, IN_FEATURES), lambda i: (i, 0)),
            # weight: tiny, resident in VMEM across all tiles.
            pl.BlockSpec((IN_FEATURES, OUT_FEATURES), lambda i: (0, 0)),
        ],
        out_specs=pl.BlockSpec((TB, OUT_FEATURES), lambda i: (i, 0)),
        compiler_params=pltpu.CompilerParams(
            dimension_semantics=("parallel",),
        ),
        cost_estimate=pl.CostEstimate(
            flops=2 * B * IN_FEATURES * OUT_FEATURES,
            transcendentals=B * OUT_FEATURES,
            bytes_accessed=bytes_x + bytes_w + bytes_o,
        ),
    )(x, wt)

    return out


if __name__ == "__main__":
    key = jax.random.PRNGKey(0)
    k_x, k_w, k_x2 = jax.random.split(key, 3)

    # Deterministic init mimicking nn.Linear (kaiming-uniform-ish bound),
    # native [OUT, IN] layout.
    bound = 1.0 / (IN_FEATURES ** 0.5)
    w = jax.random.uniform(
        k_w, (OUT_FEATURES, IN_FEATURES), dtype=jnp.float32,
        minval=-bound, maxval=bound)

    # Small-batch check (single tile).
    B = 8
    x = jax.random.normal(k_x, (B, IN_FEATURES), dtype=jnp.float32)
    out = jax.block_until_ready(linear_softmax(x, w))
    ref = jax.nn.softmax(x @ w.T, axis=1)
    assert out.shape == (B, OUT_FEATURES)
    assert bool(jnp.allclose(out, ref, atol=2e-3, rtol=2e-3)), float(
        jnp.max(jnp.abs(out - ref)))

    # Multi-tile + partial tail check (B not a multiple of the tile size);
    # exercises the no-pad ragged-grid path.
    B2 = 20
    x2 = jax.random.normal(k_x2, (B2, IN_FEATURES), dtype=jnp.float32)
    out2 = jax.block_until_ready(linear_softmax(x2, w, block_b=8))
    ref2 = jax.nn.softmax(x2 @ w.T, axis=1)
    assert out2.shape == (B2, OUT_FEATURES)
    assert bool(jnp.allclose(out2, ref2, atol=2e-3, rtol=2e-3)), float(
        jnp.max(jnp.abs(out2 - ref2)))

    print("KERNEL_OK")
</pallas_src>

<mosaic_0001>
module attributes {stable_mosaic.version = 11 : i64} {
  func.func @linear_softmax_kernel(%arg0: i32, %arg1: memref<8x300xf32, #tpu.memory_space<vmem>>, %arg2: memref<300x4xf32, #tpu.memory_space<vmem>>, %arg3: memref<8x4xf32, #tpu.memory_space<vmem>>) attributes {dimension_semantics = [#tpu.dimension_semantics<parallel>], iteration_bounds = array<i64: 1>, scalar_prefetch = 0 : i64, scratch_operands = 0 : i64, tpu.core_type = #tpu.core_type<tc>, window_params = [{transform_indices = @transform_0, window_bounds = array<i64: 8, 300>}, {pipeline_mode = #tpu.pipeline_mode<synchronous>, transform_indices = @transform_1, window_bounds = array<i64: 300, 4>}, {transform_indices = @transform_2, window_bounds = array<i64: 8, 4>}]} {
    %c0 = arith.constant 0 : index
    %c0_0 = arith.constant 0 : index
    %0 = vector.load %arg1[%c0, %c0_0] : memref<8x300xf32, #tpu.memory_space<vmem>>, vector<8x300xf32>
    %c0_1 = arith.constant 0 : index
    %c0_2 = arith.constant 0 : index
    %1 = vector.load %arg2[%c0_1, %c0_2] : memref<300x4xf32, #tpu.memory_space<vmem>>, vector<300x4xf32>
    %cst = arith.constant dense<0.000000e+00> : vector<8x4xf32>
    %2 = tpu.matmul %0, %1, %cst {dimension_numbers = #tpu.dot_dimension_numbers<[1], [0], [0], [1], [0, 0, 1, 1], [], []>, precision = #tpu.contract_precision<fp32>} : vector<8x300xf32>, vector<300x4xf32>, vector<8x4xf32> -> vector<8x4xf32>
    %cst_3 = arith.constant dense<0xFF800000> : vector<8xf32>
    %3 = vector.multi_reduction <maximumf>, %2, %cst_3 [1] : vector<8x4xf32> to vector<8xf32>
    %4 = vector.shape_cast %3 : vector<8xf32> to vector<8x1xf32>
    %5 = vector.broadcast %4 : vector<8x1xf32> to vector<8x4xf32>
    %6 = arith.subf %2, %5 : vector<8x4xf32>
    %7 = math.exp %6 : vector<8x4xf32>
    %cst_4 = arith.constant dense<0.000000e+00> : vector<8xf32>
    %8 = vector.multi_reduction <add>, %7, %cst_4 [1] : vector<8x4xf32> to vector<8xf32>
    %9 = vector.shape_cast %8 : vector<8xf32> to vector<8x1xf32>
    %10 = vector.broadcast %9 : vector<8x1xf32> to vector<8x4xf32>
    %11 = arith.divf %7, %10 : vector<8x4xf32>
    %c0_5 = arith.constant 0 : index
    %c0_6 = arith.constant 0 : index
    %12 = vector.load %arg3[%c0_5, %c0_6] : memref<8x4xf32, #tpu.memory_space<vmem>>, vector<8x4xf32>
    tpu.vector_store %arg3[%c0_5, %c0_6], %11 {strides = array<i32>} : memref<8x4xf32, #tpu.memory_space<vmem>>, vector<8x4xf32>,
    return
  }
  func.func @transform_0(%arg0: i32) -> (i32, i32) {
    %c0_i32 = arith.constant 0 : i32
    %c0_i32_0 = arith.constant 0 : i32
    return %arg0, %c0_i32 : i32, i32
  }
  func.func @transform_1(%arg0: i32) -> (i32, i32) {
    %c0_i32 = arith.constant 0 : i32
    %c0_i32_0 = arith.constant 0 : i32
    %c0_i32_1 = arith.constant 0 : i32
    return %c0_i32, %c0_i32_0 : i32, i32
  }
  func.func @transform_2(%arg0: i32) -> (i32, i32) {
    %c0_i32 = arith.constant 0 : i32
    %c0_i32_0 = arith.constant 0 : i32
    return %arg0, %c0_i32 : i32, i32
  }
}

</mosaic_0001>

<llo_original>
// kernel: linear_softmax.1
$region0: #{linear_softmax.1}
  #allocation0 [shape = 'u32[]', space=smem, size = 0x4, offset = 0x4, fixed_abs, tag = 'smem constant byte address 0x4 - core index']
  #allocation1 [shape = 'u32[144,128]{1,0:T(1,128)}', space=vmem, size = 0x12000, scoped, tag = 'internal scratch']
  %s0 = inlined_call_operand.vmem [shape: f32[8,300], index: 0, kind: input, shape index: {}]
  %s1 = inlined_call_operand.vmem [shape: f32[300,4], index: 1, kind: input, shape index: {}]
  %s2 = inlined_call_operand.vmem [shape: f32[8,4], index: 2, kind: output, shape index: {}]
  %s3 = sld [smem:[#allocation0]]
  $region18: #{linear_softmax.1} parent=0
    _
  %s5 = ssub.s32 1, %s3
  %s6 = scalar_select 0, %s5, %s3
  // Predicated region
  $region2: #{linear_softmax.1} parent=0 // pred_check
    _
  $region3: #{linear_softmax.1} parent=0 // pred_check_branch
    %8 = sbr.rel (0) target = $region5
  $region4: #{linear_softmax.1} parent=0 // pred_region
    _
  $region5: #{linear_softmax.1} parent=0 // pred_fallthru
    _
  // Predicated region
  $region6: #{linear_softmax.1} parent=0 // pred_check
    _
  $region7: #{linear_softmax.1} parent=0 // pred_check_branch
    %10 = sbr.rel (0) target = $region9
  $region8: #{linear_softmax.1} parent=0 // pred_region
    _
  $region9: #{linear_softmax.1} parent=0 // pred_fallthru
    _
  %v11 = vld [vmem:[%s0] sm:$0xff]
  %v12 = vld [vmem:[%s0 + $0x8] sm:$0xff]
  %v13 = vld [vmem:[%s0 + $0x10] sm:$0xff]
  %v14 = vld [vmem:[%s1] sm:$0xff]
  %v15 = vld [vmem:[%s1 + $0x8] sm:$0xff]
  %v16 = vld [vmem:[%s1 + $0x10] sm:$0xff]
  %v17 = vld [vmem:[%s1 + $0x18] sm:$0xff]
  %v18 = vld [vmem:[%s1 + $0x20] sm:$0xff]
  %v19 = vld [vmem:[%s1 + $0x28] sm:$0xff]
  %v20 = vld [vmem:[%s1 + $0x30] sm:$0xff]
  %v21 = vld [vmem:[%s1 + $0x38] sm:$0xff]
  %v22 = vld [vmem:[%s1 + $0x40] sm:$0xff]
  %v23 = vld [vmem:[%s1 + $0x48] sm:$0xff]
  %v24 = vld [vmem:[%s1 + $0x50] sm:$0xff]
  %v25 = vld [vmem:[%s1 + $0x58] sm:$0xff]
  %v26 = vld [vmem:[%s1 + $0x60] sm:$0xff]
  %v27 = vld [vmem:[%s1 + $0x68] sm:$0xff]
  %v28 = vld [vmem:[%s1 + $0x70] sm:$0xff]
  %v29 = vld [vmem:[%s1 + $0x78] sm:$0xff]
  %v30 = vld [vmem:[%s1 + $0x80] sm:$0xff]
  %v31 = vld [vmem:[%s1 + $0x88] sm:$0xff]
  %v32 = vld [vmem:[%s1 + $0x90] sm:$0xff]
  %v33 = vld [vmem:[%s1 + $0x98] sm:$0xff]
  %v34 = vld [vmem:[%s1 + $0xa0] sm:$0xff]
  %v35 = vld [vmem:[%s1 + $0xa8] sm:$0xff]
  %v36 = vld [vmem:[%s1 + $0xb0] sm:$0xff]
  %v37 = vld [vmem:[%s1 + $0xb8] sm:$0xff]
  %v38 = vld [vmem:[%s1 + $0xc0] sm:$0xff]
  %v39 = vld [vmem:[%s1 + $0xc8] sm:$0xff]
  %v40 = vld [vmem:[%s1 + $0xd0] sm:$0xff]
  %v41 = vld [vmem:[%s1 + $0xd8] sm:$0xff]
  %v42 = vld [vmem:[%s1 + $0xe0] sm:$0xff]
  %v43 = vld [vmem:[%s1 + $0xe8] sm:$0xff]
  %v44 = vld [vmem:[%s1 + $0xf0] sm:$0xff]
  %v45 = vld [vmem:[%s1 + $0xf8] sm:$0xff]
  %v46 = vld [vmem:[%s1 + $0x100] sm:$0xff]
  %v47 = vld [vmem:[%s1 + $0x108] sm:$0xff]
  %v48 = vld [vmem:[%s1 + $0x110] sm:$0xff]
  %v49 = vld [vmem:[%s1 + $0x118] sm:$0xff]
  %v50 = vld [vmem:[%s1 + $0x120] sm:$0xff]
  %v51 = vld [vmem:[%s1 + $0x128] sm:$0xf]
  %vm52 = vcmask 359424
  %v54 = vsel %vm52, %v13, 0
  %vm56 = vcmask 1043456
  %v58 = vsel %vm56, %v51, 0
  %60 = vmatprep.subr.mxu0 0.0
  %v61 = vand.u32 %v14, 4294901760
  %62 = vmatpush1.msra.mxu0 %v61
  %63 = vmatprep.subr.mxu0 0.0
  %v64 = vand.u32 %v15, 4294901760
  %65 = vmatpush1.msra.mxu0 %v64
  %66 = vmatprep.subr.mxu0 0.0
  %v67 = vand.u32 %v16, 4294901760
  %68 = vmatpush1.msra.mxu0 %v67
  %69 = vmatprep.subr.mxu0 0.0
  %v70 = vand.u32 %v17, 4294901760
  %71 = vmatpush1.msra.mxu0 %v70
  %72 = vmatprep.subr.mxu0 0.0
  %v73 = vand.u32 %v18, 4294901760
  %74 = vmatpush1.msra.mxu0 %v73
  %75 = vmatprep.subr.mxu0 0.0
  %v76 = vand.u32 %v19, 4294901760
  %77 = vmatpush1.msra.mxu0 %v76
  %78 = vmatprep.subr.mxu0 0.0
  %v79 = vand.u32 %v20, 4294901760
  %80 = vmatpush1.msra.mxu0 %v79
  %81 = vmatprep.subr.mxu0 0.0
  %v82 = vand.u32 %v21, 4294901760
  %83 = vmatpush1.msra.mxu0 %v82
  %84 = vmatprep.subr.mxu0 0.0
  %v85 = vand.u32 %v22, 4294901760
  %86 = vmatpush1.msra.mxu0 %v85
  %87 = vmatprep.subr.mxu0 0.0
  %v88 = vand.u32 %v23, 4294901760
  %89 = vmatpush1.msra.mxu0 %v88
  %90 = vmatprep.subr.mxu0 0.0
  %v91 = vand.u32 %v24, 4294901760
  %92 = vmatpush1.msra.mxu0 %v91
  %93 = vmatprep.subr.mxu0 0.0
  %v94 = vand.u32 %v25, 4294901760
  %95 = vmatpush1.msra.mxu0 %v94
  %96 = vmatprep.subr.mxu0 0.0
  %v97 = vand.u32 %v26, 4294901760
  %98 = vmatpush1.msra.mxu0 %v97
  %99 = vmatprep.subr.mxu0 0.0
  %v100 = vand.u32 %v27, 4294901760
  %101 = vmatpush1.msra.mxu0 %v100
  %102 = vmatprep.subr.mxu0 0.0
  %v103 = vand.u32 %v28, 4294901760
  %104 = vmatpush1.msra.mxu0 %v103
  %105 = vmatprep.subr.mxu0 0.0
  %v106 = vand.u32 %v29, 4294901760
  %107 = vmatpush1.msra.mxu0 %v106
  %108 = vmatprep.subr.mxu0 0.0
  %v109 = vand.u32 %v30, 4294901760
  %110 = vmatpush1.msra.mxu0 %v109
  %111 = vmatprep.subr.mxu0 0.0
  %v112 = vand.u32 %v31, 4294901760
  %113 = vmatpush1.msra.mxu0 %v112
  %114 = vmatprep.subr.mxu0 0.0
  %v115 = vand.u32 %v32, 4294901760
  %116 = vmatpush1.msra.mxu0 %v115
  %117 = vmatprep.subr.mxu0 0.0
  %v118 = vand.u32 %v33, 4294901760
  %119 = vmatpush1.msra.mxu0 %v118
  %120 = vmatprep.subr.mxu0 0.0
  %v121 = vand.u32 %v34, 4294901760
  %122 = vmatpush1.msra.mxu0 %v121
  %123 = vmatprep.subr.mxu0 0.0
  %v124 = vand.u32 %v35, 4294901760
  %125 = vmatpush1.msra.mxu0 %v124
  %126 = vmatprep.subr.mxu0 0.0
  %v127 = vand.u32 %v36, 4294901760
  %128 = vmatpush1.msra.mxu0 %v127
  %129 = vmatprep.subr.mxu0 0.0
  %v130 = vand.u32 %v37, 4294901760
  %131 = vmatpush1.msra.mxu0 %v130
  %132 = vmatprep.subr.mxu0 0.0
  %v133 = vand.u32 %v38, 4294901760
  %134 = vmatpush1.msra.mxu0 %v133
  %135 = vmatprep.subr.mxu0 0.0
  %v136 = vand.u32 %v39, 4294901760
  %137 = vmatpush1.msra.mxu0 %v136
  %138 = vmatprep.subr.mxu0 0.0
  %v139 = vand.u32 %v40, 4294901760
  %140 = vmatpush1.msra.mxu0 %v139
  %141 = vmatprep.subr.mxu0 0.0
  %v142 = vand.u32 %v41, 4294901760
  %143 = vmatpush1.msra.mxu0 %v142
  %144 = vmatprep.subr.mxu0 0.0
  %v145 = vand.u32 %v42, 4294901760
  %146 = vmatpush1.msra.mxu0 %v145
  %147 = vmatprep.subr.mxu0 0.0
  %v148 = vand.u32 %v43, 4294901760
  %149 = vmatpush1.msra.mxu0 %v148
  %150 = vmatprep.subr.mxu0 0.0
  %v151 = vand.u32 %v44, 4294901760
  %152 = vmatpush1.msra.mxu0 %v151
  %153 = vmatprep.subr.mxu0 0.0
  %v154 = vand.u32 %v45, 4294901760
  %155 = vmatpush1.msra.mxu0 %v154
  %v156 = vand.u32 %v12, 4294901760
  %v157 = vsub.f32 %v12, %v156
  %v158 = vand.u32 %v157, 4294901760
  %v159 = vsub.f32 %v157, %v158
  %v160 = vand.u32 %v159, 4294901760
  %161 = vmatprep.mubr.f32.mxu0 %v160
  %v162 = vand.u32 %v11, 4294901760
  %v163 = vsub.f32 %v11, %v162
  %v164 = vand.u32 %v163, 4294901760
  %v165 = vsub.f32 %v163, %v164
  %v166 = vand.u32 %v165, 4294901760
  %167 = vmatmul.mubr.f32.gmra.mrb[0].mxu0 %v166
  %v168 = vpop.f32.mrb[0].mxu0
  %v169 = vadd.f32 0.0, %v168
  %v170 = vpop.f32.mrb[0].mxu0
  %171 = vdwg.mxu0
  %172 = vmatprep.subr.mxu0 0.0
  %v173 = vand.u32 %v14, 4294901760
  %v174 = vsub.f32 %v14, %v173
  %v175 = vand.u32 %v174, 4294901760
  %v176 = vsub.f32 %v174, %v175
  %v177 = vand.u32 %v176, 4294901760
  %178 = vmatpush1.msra.mxu0 %v177
  %179 = vmatprep.subr.mxu0 0.0
  %v180 = vand.u32 %v15, 4294901760
  %v181 = vsub.f32 %v15, %v180
  %v182 = vand.u32 %v181, 4294901760
  %v183 = vsub.f32 %v181, %v182
  %v184 = vand.u32 %v183, 4294901760
  %185 = vmatpush1.msra.mxu0 %v184
  %186 = vmatprep.subr.mxu0 0.0
  %v187 = vand.u32 %v16, 4294901760
  %v188 = vsub.f32 %v16, %v187
  %v189 = vand.u32 %v188, 4294901760
  %v190 = vsub.f32 %v188, %v189
  %v191 = vand.u32 %v190, 4294901760
  %192 = vmatpush1.msra.mxu0 %v191
  %193 = vmatprep.subr.mxu0 0.0
  %v194 = vand.u32 %v17, 4294901760
  %v195 = vsub.f32 %v17, %v194
  %v196 = vand.u32 %v195, 4294901760
  %v197 = vsub.f32 %v195, %v196
  %v198 = vand.u32 %v197, 4294901760
  %199 = vmatpush1.msra.mxu0 %v198
  %200 = vmatprep.subr.mxu0 0.0
  %v201 = vand.u32 %v18, 4294901760
  %v202 = vsub.f32 %v18, %v201
  %v203 = vand.u32 %v202, 4294901760
  %v204 = vsub.f32 %v202, %v203
  %v205 = vand.u32 %v204, 4294901760
  %206 = vmatpush1.msra.mxu0 %v205
  %207 = vmatprep.subr.mxu0 0.0
  %v208 = vand.u32 %v19, 4294901760
  %v209 = vsub.f32 %v19, %v208
  %v210 = vand.u32 %v209, 4294901760
  %v211 = vsub.f32 %v209, %v210
  %v212 = vand.u32 %v211, 4294901760
  %213 = vmatpush1.msra.mxu0 %v212
  %214 = vmatprep.subr.mxu0 0.0
  %v215 = vand.u32 %v20, 4294901760
  %v216 = vsub.f32 %v20, %v215
  %v217 = vand.u32 %v216, 4294901760
  %v218 = vsub.f32 %v216, %v217
  %v219 = vand.u32 %v218, 4294901760
  %220 = vmatpush1.msra.mxu0 %v219
  %221 = vmatprep.subr.mxu0 0.0
  %v222 = vand.u32 %v21, 4294901760
  %v223 = vsub.f32 %v21, %v222
  %v224 = vand.u32 %v223, 4294901760
  %v225 = vsub.f32 %v223, %v224
  %v226 = vand.u32 %v225, 4294901760
  %227 = vmatpush1.msra.mxu0 %v226
  %228 = vmatprep.subr.mxu0 0.0
  %v229 = vand.u32 %v22, 4294901760
  %v230 = vsub.f32 %v22, %v229
  %v231 = vand.u32 %v230, 4294901760
  %v232 = vsub.f32 %v230, %v231
  %v233 = vand.u32 %v232, 4294901760
  %234 = vmatpush1.msra.mxu0 %v233
  %235 = vmatprep.subr.mxu0 0.0
  %v236 = vand.u32 %v23, 4294901760
  %v237 = vsub.f32 %v23, %v236
  %v238 = vand.u32 %v237, 4294901760
  %v239 = vsub.f32 %v237, %v238
  %v240 = vand.u32 %v239, 4294901760
  %241 = vmatpush1.msra.mxu0 %v240
  %242 = vmatprep.subr.mxu0 0.0
  %v243 = vand.u32 %v24, 4294901760
  %v244 = vsub.f32 %v24, %v243
  %v245 = vand.u32 %v244, 4294901760
  %v246 = vsub.f32 %v244, %v245
  %v247 = vand.u32 %v246, 4294901760
  %248 = vmatpush1.msra.mxu0 %v247
  %249 = vmatprep.subr.mxu0 0.0
  %v250 = vand.u32 %v25, 4294901760
  %v251 = vsub.f32 %v25, %v250
  %v252 = vand.u32 %v251, 4294901760
  %v253 = vsub.f32 %v251, %v252
  %v254 = vand.u32 %v253, 4294901760
  %255 = vmatpush1.msra.mxu0 %v254
  %256 = vmatprep.subr.mxu0 0.0
  %v257 = vand.u32 %v26, 4294901760
  %v258 = vsub.f32 %v26, %v257
  %v259 = vand.u32 %v258, 4294901760
  %v260 = vsub.f32 %v258, %v259
  %v261 = vand.u32 %v260, 4294901760
  %262 = vmatpush1.msra.mxu0 %v261
  %263 = vmatprep.subr.mxu0 0.0
  %v264 = vand.u32 %v27, 4294901760
  %v265 = vsub.f32 %v27, %v264
  %v266 = vand.u32 %v265, 4294901760
  %v267 = vsub.f32 %v265, %v266
  %v268 = vand.u32 %v267, 4294901760
  %269 = vmatpush1.msra.mxu0 %v268
  %270 = vmatprep.subr.mxu0 0.0
  %v271 = vand.u32 %v28, 4294901760
  %v272 = vsub.f32 %v28, %v271
  %v273 = vand.u32 %v272, 4294901760
  %v274 = vsub.f32 %v272, %v273
  %v275 = vand.u32 %v274, 4294901760
  %276 = vmatpush1.msra.mxu0 %v275
  %277 = vmatprep.subr.mxu0 0.0
  %v278 = vand.u32 %v29, 4294901760
  %v279 = vsub.f32 %v29, %v278
  %v280 = vand.u32 %v279, 4294901760
  %v281 = vsub.f32 %v279, %v280
  %v282 = vand.u32 %v281, 4294901760
  %283 = vmatpush1.msra.mxu0 %v282
  %284 = vmatprep.subr.mxu0 0.0
  %v285 = vand.u32 %v30, 4294901760
  %v286 = vsub.f32 %v30, %v285
  %v287 = vand.u32 %v286, 4294901760
  %v288 = vsub.f32 %v286, %v287
  %v289 = vand.u32 %v288, 4294901760
  %290 = vmatpush1.msra.mxu0 %v289
  %291 = vmatprep.subr.mxu0 0.0
  %v292 = vand.u32 %v31, 4294901760
  %v293 = vsub.f32 %v31, %v292
  %v294 = vand.u32 %v293, 4294901760
  %v295 = vsub.f32 %v293, %v294
  %v296 = vand.u32 %v295, 4294901760
  %297 = vmatpush1.msra.mxu0 %v296
  %298 = vmatprep.subr.mxu0 0.0
  %v299 = vand.u32 %v32, 4294901760
  %v300 = vsub.f32 %v32, %v299
  %v301 = vand.u32 %v300, 4294901760
  %v302 = vsub.f32 %v300, %v301
  %v303 = vand.u32 %v302, 4294901760
  %304 = vmatpush1.msra.mxu0 %v303
  %305 = vmatprep.subr.mxu0 0.0
  %v306 = vand.u32 %v33, 4294901760
  %v307 = vsub.f32 %v33, %v306
  %v308 = vand.u32 %v307, 4294901760
  %v309 = vsub.f32 %v307, %v308
  %v310 = vand.u32 %v309, 4294901760
  %311 = vmatpush1.msra.mxu0 %v310
  %312 = vmatprep.subr.mxu0 0.0
  %v313 = vand.u32 %v34, 4294901760
  %v314 = vsub.f32 %v34, %v313
  %v315 = vand.u32 %v314, 4294901760
  %v316 = vsub.f32 %v314, %v315
  %v317 = vand.u32 %v316, 4294901760
  %318 = vmatpush1.msra.mxu0 %v317
  %319 = vmatprep.subr.mxu0 0.0
  %v320 = vand.u32 %v35, 4294901760
  %v321 = vsub.f32 %v35, %v320
  %v322 = vand.u32 %v321, 4294901760
  %v323 = vsub.f32 %v321, %v322
  %v324 = vand.u32 %v323, 4294901760
  %325 = vmatpush1.msra.mxu0 %v324
  %326 = vmatprep.subr.mxu0 0.0
  %v327 = vand.u32 %v36, 4294901760
  %v328 = vsub.f32 %v36, %v327
  %v329 = vand.u32 %v328, 4294901760
  %v330 = vsub.f32 %v328, %v329
  %v331 = vand.u32 %v330, 4294901760
  %332 = vmatpush1.msra.mxu0 %v331
  %333 = vmatprep.subr.mxu0 0.0
  %v334 = vand.u32 %v37, 4294901760
  %v335 = vsub.f32 %v37, %v334
  %v336 = vand.u32 %v335, 4294901760
  %v337 = vsub.f32 %v335, %v336
  %v338 = vand.u32 %v337, 4294901760
  %339 = vmatpush1.msra.mxu0 %v338
  %340 = vmatprep.subr.mxu0 0.0
  %v341 = vand.u32 %v38, 4294901760
  %v342 = vsub.f32 %v38, %v341
  %v343 = vand.u32 %v342, 4294901760
  %v344 = vsub.f32 %v342, %v343
  %v345 = vand.u32 %v344, 4294901760
  %346 = vmatpush1.msra.mxu0 %v345
  %347 = vmatprep.subr.mxu0 0.0
  %v348 = vand.u32 %v39, 4294901760
  %v349 = vsub.f32 %v39, %v348
  %v350 = vand.u32 %v349, 4294901760
  %v351 = vsub.f32 %v349, %v350
  %v352 = vand.u32 %v351, 4294901760
  %353 = vmatpush1.msra.mxu0 %v352
  %354 = vmatprep.subr.mxu0 0.0
  %v355 = vand.u32 %v40, 4294901760
  %v356 = vsub.f32 %v40, %v355
  %v357 = vand.u32 %v356, 4294901760
  %v358 = vsub.f32 %v356, %v357
  %v359 = vand.u32 %v358, 4294901760
  %360 = vmatpush1.msra.mxu0 %v359
  %361 = vmatprep.subr.mxu0 0.0
  %v362 = vand.u32 %v41, 4294901760
  %v363 = vsub.f32 %v41, %v362
  %v364 = vand.u32 %v363, 4294901760
  %v365 = vsub.f32 %v363, %v364
  %v366 = vand.u32 %v365, 4294901760
  %367 = vmatpush1.msra.mxu0 %v366
  %368 = vmatprep.subr.mxu0 0.0
  %v369 = vand.u32 %v42, 4294901760
  %v370 = vsub.f32 %v42, %v369
  %v371 = vand.u32 %v370, 4294901760
  %v372 = vsub.f32 %v370, %v371
  %v373 = vand.u32 %v372, 4294901760
  %374 = vmatpush1.msra.mxu0 %v373
  %375 = vmatprep.subr.mxu0 0.0
  %v376 = vand.u32 %v43, 4294901760
  %v377 = vsub.f32 %v43, %v376
  %v378 = vand.u32 %v377, 4294901760
  %v379 = vsub.f32 %v377, %v378
  %v380 = vand.u32 %v379, 4294901760
  %381 = vmatpush1.msra.mxu0 %v380
  %382 = vmatprep.subr.mxu0 0.0
  %v383 = vand.u32 %v44, 4294901760
  %v384 = vsub.f32 %v44, %v383
  %v385 = vand.u32 %v384, 4294901760
  %v386 = vsub.f32 %v384, %v385
  %v387 = vand.u32 %v386, 4294901760
  %388 = vmatpush1.msra.mxu0 %v387
  %389 = vmatprep.subr.mxu0 0.0
  %v390 = vand.u32 %v45, 4294901760
  %v391 = vsub.f32 %v45, %v390
  %v392 = vand.u32 %v391, 4294901760
  %v393 = vsub.f32 %v391, %v392
  %v394 = vand.u32 %v393, 4294901760
  %395 = vmatpush1.msra.mxu0 %v394
  %v396 = vand.u32 %v12, 4294901760
  %397 = vmatprep.mubr.f32.mxu0 %v396
  %v398 = vand.u32 %v11, 4294901760
  %399 = vmatmul.mubr.f32.gmra.mrb[0].mxu0 %v398
  %v400 = vpop.f32.mrb[0].mxu0
  %v401 = vadd.f32 %v169, %v400
  %v402 = vpop.f32.mrb[0].mxu0
  %403 = vdwg.mxu0
  %404 = vmatprep.subr.mxu0 0.0
  %v405 = vand.u32 %v14, 4294901760
  %v406 = vsub.f32 %v14, %v405
  %407 = vmatpush1.msra.mxu0 %v406
  %408 = vmatprep.subr.mxu0 0.0
  %v409 = vand.u32 %v15, 4294901760
  %v410 = vsub.f32 %v15, %v409
  %411 = vmatpush1.msra.mxu0 %v410
  %412 = vmatprep.subr.mxu0 0.0
  %v413 = vand.u32 %v16, 4294901760
  %v414 = vsub.f32 %v16, %v413
  %415 = vmatpush1.msra.mxu0 %v414
  %416 = vmatprep.subr.mxu0 0.0
  %v417 = vand.u32 %v17, 4294901760
  %v418 = vsub.f32 %v17, %v417
  %419 = vmatpush1.msra.mxu0 %v418
  %420 = vmatprep.subr.mxu0 0.0
  %v421 = vand.u32 %v18, 4294901760
  %v422 = vsub.f32 %v18, %v421
  %423 = vmatpush1.msra.mxu0 %v422
  %424 = vmatprep.subr.mxu0 0.0
  %v425 = vand.u32 %v19, 4294901760
  %v426 = vsub.f32 %v19, %v425
  %427 = vmatpush1.msra.mxu0 %v426
  %428 = vmatprep.subr.mxu0 0.0
  %v429 = vand.u32 %v20, 4294901760
  %v430 = vsub.f32 %v20, %v429
  %431 = vmatpush1.msra.mxu0 %v430
  %432 = vmatprep.subr.mxu0 0.0
  %v433 = vand.u32 %v21, 4294901760
  %v434 = vsub.f32 %v21, %v433
  %435 = vmatpush1.msra.mxu0 %v434
  %436 = vmatprep.subr.mxu0 0.0
  %v437 = vand.u32 %v22, 4294901760
  %v438 = vsub.f32 %v22, %v437
  %439 = vmatpush1.msra.mxu0 %v438
  %440 = vmatprep.subr.mxu0 0.0
  %v441 = vand.u32 %v23, 4294901760
  %v442 = vsub.f32 %v23, %v441
  %443 = vmatpush1.msra.mxu0 %v442
  %444 = vmatprep.subr.mxu0 0.0
  %v445 = vand.u32 %v24, 4294901760
  %v446 = vsub.f32 %v24, %v445
  %447 = vmatpush1.msra.mxu0 %v446
  %448 = vmatprep.subr.mxu0 0.0
  %v449 = vand.u32 %v25, 4294901760
  %v450 = vsub.f32 %v25, %v449
  %451 = vmatpush1.msra.mxu0 %v450
  %452 = vmatprep.subr.mxu0 0.0
  %v453 = vand.u32 %v26, 4294901760
  %v454 = vsub.f32 %v26, %v453
  %455 = vmatpush1.msra.mxu0 %v454
  %456 = vmatprep.subr.mxu0 0.0
  %v457 = vand.u32 %v27, 4294901760
  %v458 = vsub.f32 %v27, %v457
  %459 = vmatpush1.msra.mxu0 %v458
  %460 = vmatprep.subr.mxu0 0.0
  %v461 = vand.u32 %v28, 4294901760
  %v462 = vsub.f32 %v28, %v461
  %463 = vmatpush1.msra.mxu0 %v462
  %464 = vmatprep.subr.mxu0 0.0
  %v465 = vand.u32 %v29, 4294901760
  %v466 = vsub.f32 %v29, %v465
  %467 = vmatpush1.msra.mxu0 %v466
  %468 = vmatprep.subr.mxu0 0.0
  %v469 = vand.u32 %v30, 4294901760
  %v470 = vsub.f32 %v30, %v469
  %471 = vmatpush1.msra.mxu0 %v470
  %472 = vmatprep.subr.mxu0 0.0
  %v473 = vand.u32 %v31, 4294901760
  %v474 = vsub.f32 %v31, %v473
  %475 = vmatpush1.msra.mxu0 %v474
  %476 = vmatprep.subr.mxu0 0.0
  %v477 = vand.u32 %v32, 4294901760
  %v478 = vsub.f32 %v32, %v477
  %479 = vmatpush1.msra.mxu0 %v478
  %480 = vmatprep.subr.mxu0 0.0
  %v481 = vand.u32 %v33, 4294901760
  %v482 = vsub.f32 %v33, %v481
  %483 = vmatpush1.msra.mxu0 %v482
  %484 = vmatprep.subr.mxu0 0.0
  %v485 = vand.u32 %v34, 4294901760
  %v486 = vsub.f32 %v34, %v485
  %487 = vmatpush1.msra.mxu0 %v486
  %488 = vmatprep.subr.mxu0 0.0
  %v489 = vand.u32 %v35, 4294901760
  %v490 = vsub.f32 %v35, %v489
  %491 = vmatpush1.msra.mxu0 %v490
  %492 = vmatprep.subr.mxu0 0.0
  %v493 = vand.u32 %v36, 4294901760
  %v494 = vsub.f32 %v36, %v493
  %495 = vmatpush1.msra.mxu0 %v494
  %496 = vmatprep.subr.mxu0 0.0
  %v497 = vand.u32 %v37, 4294901760
  %v498 = vsub.f32 %v37, %v497
  %499 = vmatpush1.msra.mxu0 %v498
  %500 = vmatprep.subr.mxu0 0.0
  %v501 = vand.u32 %v38, 4294901760
  %v502 = vsub.f32 %v38, %v501
  %503 = vmatpush1.msra.mxu0 %v502
  %504 = vmatprep.subr.mxu0 0.0
  %v505 = vand.u32 %v39, 4294901760
  %v506 = vsub.f32 %v39, %v505
  %507 = vmatpush1.msra.mxu0 %v506
  %508 = vmatprep.subr.mxu0 0.0
  %v509 = vand.u32 %v40, 4294901760
  %v510 = vsub.f32 %v40, %v509
  %511 = vmatpush1.msra.mxu0 %v510
  %512 = vmatprep.subr.mxu0 0.0
  %v513 = vand.u32 %v41, 4294901760
  %v514 = vsub.f32 %v41, %v513
  %515 = vmatpush1.msra.mxu0 %v514
  %516 = vmatprep.subr.mxu0 0.0
  %v517 = vand.u32 %v42, 4294901760
  %v518 = vsub.f32 %v42, %v517
  %519 = vmatpush1.msra.mxu0 %v518
  %520 = vmatprep.subr.mxu0 0.0
  %v521 = vand.u32 %v43, 4294901760
  %v522 = vsub.f32 %v43, %v521
  %523 = vmatpush1.msra.mxu0 %v522
  %524 = vmatprep.subr.mxu0 0.0
  %v525 = vand.u32 %v44, 4294901760
  %v526 = vsub.f32 %v44, %v525
  %527 = vmatpush1.msra.mxu0 %v526
  %528 = vmatprep.subr.mxu0 0.0
  %v529 = vand.u32 %v45, 4294901760
  %v530 = vsub.f32 %v45, %v529
  %531 = vmatpush1.msra.mxu0 %v530
  %v532 = vand.u32 %v12, 4294901760
  %v533 = vsub.f32 %v12, %v532
  %534 = vmatprep.mubr.f32.mxu0 %v533
  %v535 = vand.u32 %v11, 4294901760
  %v536 = vsub.f32 %v11, %v535
  %537 = vmatmul.mubr.f32.gmra.mrb[0].mxu0 %v536
  %v538 = vpop.f32.mrb[0].mxu0
  %v539 = vadd.f32 %v401, %v538
  %v540 = vpop.f32.mrb[0].mxu0
  %541 = vdwg.mxu0
  %542 = vmatprep.subr.mxu0 0.0
  %v543 = vand.u32 %v14, 4294901760
  %544 = vmatpush1.msra.mxu0 %v543
  %545 = vmatprep.subr.mxu0 0.0
  %v546 = vand.u32 %v15, 4294901760
  %547 = vmatpush1.msra.mxu0 %v546
  %548 = vmatprep.subr.mxu0 0.0
  %v549 = vand.u32 %v16, 4294901760
  %550 = vmatpush1.msra.mxu0 %v549
  %551 = vmatprep.subr.mxu0 0.0
  %v552 = vand.u32 %v17, 4294901760
  %553 = vmatpush1.msra.mxu0 %v552
  %554 = vmatprep.subr.mxu0 0.0
  %v555 = vand.u32 %v18, 4294901760
  %556 = vmatpush1.msra.mxu0 %v555
  %557 = vmatprep.subr.mxu0 0.0
  %v558 = vand.u32 %v19, 4294901760
  %559 = vmatpush1.msra.mxu0 %v558
  %560 = vmatprep.subr.mxu0 0.0
  %v561 = vand.u32 %v20, 4294901760
  %562 = vmatpush1.msra.mxu0 %v561
  %563 = vmatprep.subr.mxu0 0.0
  %v564 = vand.u32 %v21, 4294901760
  %565 = vmatpush1.msra.mxu0 %v564
  %566 = vmatprep.subr.mxu0 0.0
  %v567 = vand.u32 %v22, 4294901760
  %568 = vmatpush1.msra.mxu0 %v567
  %569 = vmatprep.subr.mxu0 0.0
  %v570 = vand.u32 %v23, 4294901760
  %571 = vmatpush1.msra.mxu0 %v570
  %572 = vmatprep.subr.mxu0 0.0
  %v573 = vand.u32 %v24, 4294901760
  %574 = vmatpush1.msra.mxu0 %v573
  %575 = vmatprep.subr.mxu0 0.0
  %v576 = vand.u32 %v25, 4294901760
  %577 = vmatpush1.msra.mxu0 %v576
  %578 = vmatprep.subr.mxu0 0.0
  %v579 = vand.u32 %v26, 4294901760
  %580 = vmatpush1.msra.mxu0 %v579
  %581 = vmatprep.subr.mxu0 0.0
  %v582 = vand.u32 %v27, 4294901760
  %583 = vmatpush1.msra.mxu0 %v582
  %584 = vmatprep.subr.mxu0 0.0
  %v585 = vand.u32 %v28, 4294901760
  %586 = vmatpush1.msra.mxu0 %v585
  %587 = vmatprep.subr.mxu0 0.0
  %v588 = vand.u32 %v29, 4294901760
  %589 = vmatpush1.msra.mxu0 %v588
  %590 = vmatprep.subr.mxu0 0.0
  %v591 = vand.u32 %v30, 4294901760
  %592 = vmatpush1.msra.mxu0 %v591
  %593 = vmatprep.subr.mxu0 0.0
  %v594 = vand.u32 %v31, 4294901760
  %595 = vmatpush1.msra.mxu0 %v594
  %596 = vmatprep.subr.mxu0 0.0
  %v597 = vand.u32 %v32, 4294901760
  %598 = vmatpush1.msra.mxu0 %v597
  %599 = vmatprep.subr.mxu0 0.0
  %v600 = vand.u32 %v33, 4294901760
  %601 = vmatpush1.msra.mxu0 %v600
  %602 = vmatprep.subr.mxu0 0.0
  %v603 = vand.u32 %v34, 4294901760
  %604 = vmatpush1.msra.mxu0 %v603
  %605 = vmatprep.subr.mxu0 0.0
  %v606 = vand.u32 %v35, 4294901760
  %607 = vmatpush1.msra.mxu0 %v606
  %608 = vmatprep.subr.mxu0 0.0
  %v609 = vand.u32 %v36, 4294901760
  %610 = vmatpush1.msra.mxu0 %v609
  %611 = vmatprep.subr.mxu0 0.0
  %v612 = vand.u32 %v37, 4294901760
  %613 = vmatpush1.msra.mxu0 %v612
  %614 = vmatprep.subr.mxu0 0.0
  %v615 = vand.u32 %v38, 4294901760
  %616 = vmatpush1.msra.mxu0 %v615
  %617 = vmatprep.subr.mxu0 0.0
  %v618 = vand.u32 %v39, 4294901760
  %619 = vmatpush1.msra.mxu0 %v618
  %620 = vmatprep.subr.mxu0 0.0
  %v621 = vand.u32 %v40, 4294901760
  %622 = vmatpush1.msra.mxu0 %v621
  %623 = vmatprep.subr.mxu0 0.0
  %v624 = vand.u32 %v41, 4294901760
  %625 = vmatpush1.msra.mxu0 %v624
  %626 = vmatprep.subr.mxu0 0.0
  %v627 = vand.u32 %v42, 4294901760
  %628 = vmatpush1.msra.mxu0 %v627
  %629 = vmatprep.subr.mxu0 0.0
  %v630 = vand.u32 %v43, 4294901760
  %631 = vmatpush1.msra.mxu0 %v630
  %632 = vmatprep.subr.mxu0 0.0
  %v633 = vand.u32 %v44, 4294901760
  %634 = vmatpush1.msra.mxu0 %v633
  %635 = vmatprep.subr.mxu0 0.0
  %v636 = vand.u32 %v45, 4294901760
  %637 = vmatpush1.msra.mxu0 %v636
  %v638 = vand.u32 %v12, 4294901760
  %v639 = vsub.f32 %v12, %v638
  %v640 = vand.u32 %v639, 4294901760
  %641 = vmatprep.mubr.f32.mxu0 %v640
  %v642 = vand.u32 %v11, 4294901760
  %v643 = vsub.f32 %v11, %v642
  %v644 = vand.u32 %v643, 4294901760
  %645 = vmatmul.mubr.f32.gmra.mrb[0].mxu0 %v644
  %v646 = vpop.f32.mrb[0].mxu0
  %v647 = vadd.f32 %v539, %v646
  %v648 = vpop.f32.mrb[0].mxu0
  %649 = vdwg.mxu0
  %650 = vmatprep.subr.mxu0 0.0
  %v651 = vand.u32 %v14, 4294901760
  %v652 = vsub.f32 %v14, %v651
  %v653 = vand.u32 %v652, 4294901760
  %654 = vmatpush1.msra.mxu0 %v653
  %655 = vmatprep.subr.mxu0 0.0
  %v656 = vand.u32 %v15, 4294901760
  %v657 = vsub.f32 %v15, %v656
  %v658 = vand.u32 %v657, 4294901760
  %659 = vmatpush1.msra.mxu0 %v658
  %660 = vmatprep.subr.mxu0 0.0
  %v661 = vand.u32 %v16, 4294901760
  %v662 = vsub.f32 %v16, %v661
  %v663 = vand.u32 %v662, 4294901760
  %664 = vmatpush1.msra.mxu0 %v663
  %665 = vmatprep.subr.mxu0 0.0
  %v666 = vand.u32 %v17, 4294901760
  %v667 = vsub.f32 %v17, %v666
  %v668 = vand.u32 %v667, 4294901760
  %669 = vmatpush1.msra.mxu0 %v668
  %670 = vmatprep.subr.mxu0 0.0
  %v671 = vand.u32 %v18, 4294901760
  %v672 = vsub.f32 %v18, %v671
  %v673 = vand.u32 %v672, 4294901760
  %674 = vmatpush1.msra.mxu0 %v673
  %675 = vmatprep.subr.mxu0 0.0
  %v676 = vand.u32 %v19, 4294901760
  %v677 = vsub.f32 %v19, %v676
  %v678 = vand.u32 %v677, 4294901760
  %679 = vmatpush1.msra.mxu0 %v678
  %680 = vmatprep.subr.mxu0 0.0
  %v681 = vand.u32 %v20, 4294901760
  %v682 = vsub.f32 %v20, %v681
  %v683 = vand.u32 %v682, 4294901760
  %684 = vmatpush1.msra.mxu0 %v683
  %685 = vmatprep.subr.mxu0 0.0
  %v686 = vand.u32 %v21, 4294901760
  %v687 = vsub.f32 %v21, %v686
  %v688 = vand.u32 %v687, 4294901760
  %689 = vmatpush1.msra.mxu0 %v688
  %690 = vmatprep.subr.mxu0 0.0
  %v691 = vand.u32 %v22, 4294901760
  %v692 = vsub.f32 %v22, %v691
  %v693 = vand.u32 %v692, 4294901760
  %694 = vmatpush1.msra.mxu0 %v693
  %695 = vmatprep.subr.mxu0 0.0
  %v696 = vand.u32 %v23, 4294901760
  %v697 = vsub.f32 %v23, %v696
  %v698 = vand.u32 %v697, 4294901760
  %699 = vmatpush1.msra.mxu0 %v698
  %700 = vmatprep.subr.mxu0 0.0
  %v701 = vand.u32 %v24, 4294901760
  %v702 = vsub.f32 %v24, %v701
  %v703 = vand.u32 %v702, 4294901760
  %704 = vmatpush1.msra.mxu0 %v703
  %705 = vmatprep.subr.mxu0 0.0
  %v706 = vand.u32 %v25, 4294901760
  %v707 = vsub.f32 %v25, %v706
  %v708 = vand.u32 %v707, 4294901760
  %709 = vmatpush1.msra.mxu0 %v708
  %710 = vmatprep.subr.mxu0 0.0
  %v711 = vand.u32 %v26, 4294901760
  %v712 = vsub.f32 %v26, %v711
  %v713 = vand.u32 %v712, 4294901760
  %714 = vmatpush1.msra.mxu0 %v713
  %715 = vmatprep.subr.mxu0 0.0
  %v716 = vand.u32 %v27, 4294901760
  %v717 = vsub.f32 %v27, %v716
  %v718 = vand.u32 %v717, 4294901760
  %719 = vmatpush1.msra.mxu0 %v718
  %720 = vmatprep.subr.mxu0 0.0
  %v721 = vand.u32 %v28, 4294901760
  %v722 = vsub.f32 %v28, %v721
  %v723 = vand.u32 %v722, 4294901760
  %724 = vmatpush1.msra.mxu0 %v723
  %725 = vmatprep.subr.mxu0 0.0
  %v726 = vand.u32 %v29, 4294901760
  %v727 = vsub.f32 %v29, %v726
  %v728 = vand.u32 %v727, 4294901760
  %729 = vmatpush1.msra.mxu0 %v728
  %730 = vmatprep.subr.mxu0 0.0
  %v731 = vand.u32 %v30, 4294901760
  %v732 = vsub.f32 %v30, %v731
  %v733 = vand.u32 %v732, 4294901760
  %734 = vmatpush1.msra.mxu0 %v733
  %735 = vmatprep.subr.mxu0 0.0
  %v736 = vand.u32 %v31, 4294901760
  %v737 = vsub.f32 %v31, %v736
  %v738 = vand.u32 %v737, 4294901760
  %739 = vmatpush1.msra.mxu0 %v738
  %740 = vmatprep.subr.mxu0 0.0
  %v741 = vand.u32 %v32, 4294901760
  %v742 = vsub.f32 %v32, %v741
  %v743 = vand.u32 %v742, 4294901760
  %744 = vmatpush1.msra.mxu0 %v743
  %745 = vmatprep.subr.mxu0 0.0
  %v746 = vand.u32 %v33, 4294901760
  %v747 = vsub.f32 %v33, %v746
  %v748 = vand.u32 %v747, 4294901760
  %749 = vmatpush1.msra.mxu0 %v748
  %750 = vmatprep.subr.mxu0 0.0
  %v751 = vand.u32 %v34, 4294901760
  %v752 = vsub.f32 %v34, %v751
  %v753 = vand.u32 %v752, 4294901760
  %754 = vmatpush1.msra.mxu0 %v753
  %755 = vmatprep.subr.mxu0 0.0
  %v756 = vand.u32 %v35, 4294901760
  %v757 = vsub.f32 %v35, %v756
  %v758 = vand.u32 %v757, 4294901760
  %759 = vmatpush1.msra.mxu0 %v758
  %760 = vmatprep.subr.mxu0 0.0
  %v761 = vand.u32 %v36, 4294901760
  %v762 = vsub.f32 %v36, %v761
  %v763 = vand.u32 %v762, 4294901760
  %764 = vmatpush1.msra.mxu0 %v763
  %765 = vmatprep.subr.mxu0 0.0
  %v766 = vand.u32 %v37, 4294901760
  %v767 = vsub.f32 %v37, %v766
  %v768 = vand.u32 %v767, 4294901760
  %769 = vmatpush1.msra.mxu0 %v768
  %770 = vmatprep.subr.mxu0 0.0
  %v771 = vand.u32 %v38, 4294901760
  %v772 = vsub.f32 %v38, %v771
  %v773 = vand.u32 %v772, 4294901760
  %774 = vmatpush1.msra.mxu0 %v773
  %775 = vmatprep.subr.mxu0 0.0
  %v776 = vand.u32 %v39, 4294901760
  %v777 = vsub.f32 %v39, %v776
  %v778 = vand.u32 %v777, 4294901760
  %779 = vmatpush1.msra.mxu0 %v778
  %780 = vmatprep.subr.mxu0 0.0
  %v781 = vand.u32 %v40, 4294901760
  %v782 = vsub.f32 %v40, %v781
  %v783 = vand.u32 %v782, 4294901760
  %784 = vmatpush1.msra.mxu0 %v783
  %785 = vmatprep.subr.mxu0 0.0
  %v786 = vand.u32 %v41, 4294901760
  %v787 = vsub.f32 %v41, %v786
  %v788 = vand.u32 %v787, 4294901760
  %789 = vmatpush1.msra.mxu0 %v788
  %790 = vmatprep.subr.mxu0 0.0
  %v791 = vand.u32 %v42, 4294901760
  %v792 = vsub.f32 %v42, %v791
  %v793 = vand.u32 %v792, 4294901760
  %794 = vmatpush1.msra.mxu0 %v793
  %795 = vmatprep.subr.mxu0 0.0
  %v796 = vand.u32 %v43, 4294901760
  %v797 = vsub.f32 %v43, %v796
  %v798 = vand.u32 %v797, 4294901760
  %799 = vmatpush1.msra.mxu0 %v798
  %800 = vmatprep.subr.mxu0 0.0
  %v801 = vand.u32 %v44, 4294901760
  %v802 = vsub.f32 %v44, %v801
  %v803 = vand.u32 %v802, 4294901760
  %804 = vmatpush1.msra.mxu0 %v803
  %805 = vmatprep.subr.mxu0 0.0
  %v806 = vand.u32 %v45, 4294901760
  %v807 = vsub.f32 %v45, %v806
  %v808 = vand.u32 %v807, 4294901760
  %809 = vmatpush1.msra.mxu0 %v808
  %v810 = vand.u32 %v12, 4294901760
  %811 = vmatprep.mubr.f32.mxu0 %v810
  %v812 = vand.u32 %v11, 4294901760
  %813 = vmatmul.mubr.f32.gmra.mrb[0].mxu0 %v812
  %v814 = vpop.f32.mrb[0].mxu0
  %v815 = vadd.f32 %v647, %v814
  %v816 = vpop.f32.mrb[0].mxu0
  %817 = vdwg.mxu0
  %818 = vmatprep.subr.mxu0 0.0
  %v819 = vand.u32 %v14, 4294901760
  %820 = vmatpush1.msra.mxu0 %v819
  %821 = vmatprep.subr.mxu0 0.0
  %v822 = vand.u32 %v15, 4294901760
  %823 = vmatpush1.msra.mxu0 %v822
  %824 = vmatprep.subr.mxu0 0.0
  %v825 = vand.u32 %v16, 4294901760
  %826 = vmatpush1.msra.mxu0 %v825
  %827 = vmatprep.subr.mxu0 0.0
  %v828 = vand.u32 %v17, 4294901760
  %829 = vmatpush1.msra.mxu0 %v828
  %830 = vmatprep.subr.mxu0 0.0
  %v831 = vand.u32 %v18, 4294901760
  %832 = vmatpush1.msra.mxu0 %v831
  %833 = vmatprep.subr.mxu0 0.0
  %v834 = vand.u32 %v19, 4294901760
  %835 = vmatpush1.msra.mxu0 %v834
  %836 = vmatprep.subr.mxu0 0.0
  %v837 = vand.u32 %v20, 4294901760
  %838 = vmatpush1.msra.mxu0 %v837
  %839 = vmatprep.subr.mxu0 0.0
  %v840 = vand.u32 %v21, 4294901760
  %841 = vmatpush1.msra.mxu0 %v840
  %842 = vmatprep.subr.mxu0 0.0
  %v843 = vand.u32 %v22, 4294901760
  %844 = vmatpush1.msra.mxu0 %v843
  %845 = vmatprep.subr.mxu0 0.0
  %v846 = vand.u32 %v23, 4294901760
  %847 = vmatpush1.msra.mxu0 %v846
  %848 = vmatprep.subr.mxu0 0.0
  %v849 = vand.u32 %v24, 4294901760
  %850 = vmatpush1.msra.mxu0 %v849
  %851 = vmatprep.subr.mxu0 0.0
  %v852 = vand.u32 %v25, 4294901760
  %853 = vmatpush1.msra.mxu0 %v852
  %854 = vmatprep.subr.mxu0 0.0
  %v855 = vand.u32 %v26, 4294901760
  %856 = vmatpush1.msra.mxu0 %v855
  %857 = vmatprep.subr.mxu0 0.0
  %v858 = vand.u32 %v27, 4294901760
  %859 = vmatpush1.msra.mxu0 %v858
  %860 = vmatprep.subr.mxu0 0.0
  %v861 = vand.u32 %v28, 4294901760
  %862 = vmatpush1.msra.mxu0 %v861
  %863 = vmatprep.subr.mxu0 0.0
  %v864 = vand.u32 %v29, 4294901760
  %865 = vmatpush1.msra.mxu0 %v864
  %866 = vmatprep.subr.mxu0 0.0
  %v867 = vand.u32 %v30, 4294901760
  %868 = vmatpush1.msra.mxu0 %v867
  %869 = vmatprep.subr.mxu0 0.0
  %v870 = vand.u32 %v31, 4294901760
  %871 = vmatpush1.msra.mxu0 %v870
  %872 = vmatprep.subr.mxu0 0.0
  %v873 = vand.u32 %v32, 4294901760
  %874 = vmatpush1.msra.mxu0 %v873
  %875 = vmatprep.subr.mxu0 0.0
  %v876 = vand.u32 %v33, 4294901760
  %877 = vmatpush1.msra.mxu0 %v876
  %878 = vmatprep.subr.mxu0 0.0
  %v879 = vand.u32 %v34, 4294901760
  %880 = vmatpush1.msra.mxu0 %v879
  %881 = vmatprep.subr.mxu0 0.0
  %v882 = vand.u32 %v35, 4294901760
  %883 = vmatpush1.msra.mxu0 %v882
  %884 = vmatprep.subr.mxu0 0.0
  %v885 = vand.u32 %v36, 4294901760
  %886 = vmatpush1.msra.mxu0 %v885
  %887 = vmatprep.subr.mxu0 0.0
  %v888 = vand.u32 %v37, 4294901760
  %889 = vmatpush1.msra.mxu0 %v888
  %890 = vmatprep.subr.mxu0 0.0
  %v891 = vand.u32 %v38, 4294901760
  %892 = vmatpush1.msra.mxu0 %v891
  %893 = vmatprep.subr.mxu0 0.0
  %v894 = vand.u32 %v39, 4294901760
  %895 = vmatpush1.msra.mxu0 %v894
  %896 = vmatprep.subr.mxu0 0.0
  %v897 = vand.u32 %v40, 4294901760
  %898 = vmatpush1.msra.mxu0 %v897
  %899 = vmatprep.subr.mxu0 0.0
  %v900 = vand.u32 %v41, 4294901760
  %901 = vmatpush1.msra.mxu0 %v900
  %902 = vmatprep.subr.mxu0 0.0
  %v903 = vand.u32 %v42, 4294901760
  %904 = vmatpush1.msra.mxu0 %v903
  %905 = vmatprep.subr.mxu0 0.0
  %v906 = vand.u32 %v43, 4294901760
  %907 = vmatpush1.msra.mxu0 %v906
  %908 = vmatprep.subr.mxu0 0.0
  %v909 = vand.u32 %v44, 4294901760
  %910 = vmatpush1.msra.mxu0 %v909
  %911 = vmatprep.subr.mxu0 0.0
  %v912 = vand.u32 %v45, 4294901760
  %913 = vmatpush1.msra.mxu0 %v912
  %v914 = vand.u32 %v12, 4294901760
  %915 = vmatprep.mubr.f32.mxu0 %v914
  %v916 = vand.u32 %v11, 4294901760
  %917 = vmatmul.mubr.f32.gmra.mrb[0].mxu0 %v916
  %v918 = vpop.f32.mrb[0].mxu0
  %v919 = vadd.f32 %v815, %v918
  %v920 = vpop.f32.mrb[0].mxu0
  %921 = vdwg.mxu0
  %922 = vmatprep.subr.mxu0 0.0
  %v923 = vand.u32 %v46, 4294901760
  %924 = vmatpush1.msra.mxu0 %v923
  %925 = vmatprep.subr.mxu0 0.0
  %v926 = vand.u32 %v47, 4294901760
  %927 = vmatpush1.msra.mxu0 %v926
  %928 = vmatprep.subr.mxu0 0.0
  %v929 = vand.u32 %v48, 4294901760
  %930 = vmatpush1.msra.mxu0 %v929
  %931 = vmatprep.subr.mxu0 0.0
  %v932 = vand.u32 %v49, 4294901760
  %933 = vmatpush1.msra.mxu0 %v932
  %934 = vmatprep.subr.mxu0 0.0
  %v935 = vand.u32 %v50, 4294901760
  %936 = vmatpush1.msra.mxu0 %v935
  %937 = vmatprep.subr.mxu0 0.0
  %v938 = vand.u32 %v58, 4294901760
  %939 = vmatpush1.msra.mxu0 %v938
  %940 = vmatprep.subr.mxu0 0.0
  %941 = vmatpush1.msra.mxu0 0.0
  %942 = vmatprep.subr.mxu0 0.0
  %943 = vmatpush1.msra.mxu0 0.0
  %944 = vmatprep.subr.mxu0 0.0
  %945 = vmatpush1.msra.mxu0 0.0
  %946 = vmatprep.subr.mxu0 0.0
  %947 = vmatpush1.msra.mxu0 0.0
  %948 = vmatprep.subr.mxu0 0.0
  %949 = vmatpush1.msra.mxu0 0.0
  %950 = vmatprep.subr.mxu0 0.0
  %951 = vmatpush1.msra.mxu0 0.0
  %952 = vmatprep.subr.mxu0 0.0
  %953 = vmatpush1.msra.mxu0 0.0
  %954 = vmatprep.subr.mxu0 0.0
  %955 = vmatpush1.msra.mxu0 0.0
  %956 = vmatprep.subr.mxu0 0.0
  %957 = vmatpush1.msra.mxu0 0.0
  %958 = vmatprep.subr.mxu0 0.0
  %959 = vmatpush1.msra.mxu0 0.0
  %960 = vmatprep.subr.mxu0 0.0
  %961 = vmatpush1.msra.mxu0 0.0
  %962 = vmatprep.subr.mxu0 0.0
  %963 = vmatpush1.msra.mxu0 0.0
  %964 = vmatprep.subr.mxu0 0.0
  %965 = vmatpush1.msra.mxu0 0.0
  %966 = vmatprep.subr.mxu0 0.0
  %967 = vmatpush1.msra.mxu0 0.0
  %968 = vmatprep.subr.mxu0 0.0
  %969 = vmatpush1.msra.mxu0 0.0
  %970 = vmatprep.subr.mxu0 0.0
  %971 = vmatpush1.msra.mxu0 0.0
  %972 = vmatprep.subr.mxu0 0.0
  %973 = vmatpush1.msra.mxu0 0.0
  %974 = vmatprep.subr.mxu0 0.0
  %975 = vmatpush1.msra.mxu0 0.0
  %976 = vmatprep.subr.mxu0 0.0
  %977 = vmatpush1.msra.mxu0 0.0
  %978 = vmatprep.subr.mxu0 0.0
  %979 = vmatpush1.msra.mxu0 0.0
  %980 = vmatprep.subr.mxu0 0.0
  %981 = vmatpush1.msra.mxu0 0.0
  %982 = vmatprep.subr.mxu0 0.0
  %983 = vmatpush1.msra.mxu0 0.0
  %984 = vmatprep.subr.mxu0 0.0
  %985 = vmatpush1.msra.mxu0 0.0
  %986 = vmatprep.subr.mxu0 0.0
  %987 = vmatpush1.msra.mxu0 0.0
  %988 = vmatprep.subr.mxu0 0.0
  %989 = vmatpush1.msra.mxu0 0.0
  %990 = vmatprep.subr.mxu0 0.0
  %991 = vmatpush1.msra.mxu0 0.0
  %992 = vmatprep.mubr.f32.mxu0 0.0
  %v993 = vand.u32 %v54, 4294901760
  %v994 = vsub.f32 %v54, %v993
  %v995 = vand.u32 %v994, 4294901760
  %v996 = vsub.f32 %v994, %v995
  %v997 = vand.u32 %v996, 4294901760
  %998 = vmatmul.mubr.f32.gmra.mrb[0].mxu0 %v997
  %v999 = vpop.f32.mrb[0].mxu0
  %v1000 = vadd.f32 %v919, %v999
  %v1001 = vpop.f32.mrb[0].mxu0
  %1002 = vdwg.mxu0
  %1003 = vmatprep.subr.mxu0 0.0
  %v1004 = vand.u32 %v46, 4294901760
  %v1005 = vsub.f32 %v46, %v1004
  %v1006 = vand.u32 %v1005, 4294901760
  %v1007 = vsub.f32 %v1005, %v1006
  %v1008 = vand.u32 %v1007, 4294901760
  %1009 = vmatpush1.msra.mxu0 %v1008
  %1010 = vmatprep.subr.mxu0 0.0
  %v1011 = vand.u32 %v47, 4294901760
  %v1012 = vsub.f32 %v47, %v1011
  %v1013 = vand.u32 %v1012, 4294901760
  %v1014 = vsub.f32 %v1012, %v1013
  %v1015 = vand.u32 %v1014, 4294901760
  %1016 = vmatpush1.msra.mxu0 %v1015
  %1017 = vmatprep.subr.mxu0 0.0
  %v1018 = vand.u32 %v48, 4294901760
  %v1019 = vsub.f32 %v48, %v1018
  %v1020 = vand.u32 %v1019, 4294901760
  %v1021 = vsub.f32 %v1019, %v1020
  %v1022 = vand.u32 %v1021, 4294901760
  %1023 = vmatpush1.msra.mxu0 %v1022
  %1024 = vmatprep.subr.mxu0 0.0
  %v1025 = vand.u32 %v49, 4294901760
  %v1026 = vsub.f32 %v49, %v1025
  %v1027 = vand.u32 %v1026, 4294901760
  %v1028 = vsub.f32 %v1026, %v1027
  %v1029 = vand.u32 %v1028, 4294901760
  %1030 = vmatpush1.msra.mxu0 %v1029
  %1031 = vmatprep.subr.mxu0 0.0
  %v1032 = vand.u32 %v50, 4294901760
  %v1033 = vsub.f32 %v50, %v1032
  %v1034 = vand.u32 %v1033, 4294901760
  %v1035 = vsub.f32 %v1033, %v1034
  %v1036 = vand.u32 %v1035, 4294901760
  %1037 = vmatpush1.msra.mxu0 %v1036
  %1038 = vmatprep.subr.mxu0 0.0
  %v1039 = vand.u32 %v58, 4294901760
  %v1040 = vsub.f32 %v58, %v1039
  %v1041 = vand.u32 %v1040, 4294901760
  %v1042 = vsub.f32 %v1040, %v1041
  %v1043 = vand.u32 %v1042, 4294901760
  %1044 = vmatpush1.msra.mxu0 %v1043
  %1045 = vmatprep.subr.mxu0 0.0
  %1046 = vmatpush1.msra.mxu0 0.0
  %1047 = vmatprep.subr.mxu0 0.0
  %1048 = vmatpush1.msra.mxu0 0.0
  %1049 = vmatprep.subr.mxu0 0.0
  %1050 = vmatpush1.msra.mxu0 0.0
  %1051 = vmatprep.subr.mxu0 0.0
  %1052 = vmatpush1.msra.mxu0 0.0
  %1053 = vmatprep.subr.mxu0 0.0
  %1054 = vmatpush1.msra.mxu0 0.0
  %1055 = vmatprep.subr.mxu0 0.0
  %1056 = vmatpush1.msra.mxu0 0.0
  %1057 = vmatprep.subr.mxu0 0.0
  %1058 = vmatpush1.msra.mxu0 0.0
  %1059 = vmatprep.subr.mxu0 0.0
  %1060 = vmatpush1.msra.mxu0 0.0
  %1061 = vmatprep.subr.mxu0 0.0
  %1062 = vmatpush1.msra.mxu0 0.0
  %1063 = vmatprep.subr.mxu0 0.0
  %1064 = vmatpush1.msra.mxu0 0.0
  %1065 = vmatprep.subr.mxu0 0.0
  %1066 = vmatpush1.msra.mxu0 0.0
  %1067 = vmatprep.subr.mxu0 0.0
  %1068 = vmatpush1.msra.mxu0 0.0
  %1069 = vmatprep.subr.mxu0 0.0
  %1070 = vmatpush1.msra.mxu0 0.0
  %1071 = vmatprep.subr.mxu0 0.0
  %1072 = vmatpush1.msra.mxu0 0.0
  %1073 = vmatprep.subr.mxu0 0.0
  %1074 = vmatpush1.msra.mxu0 0.0
  %1075 = vmatprep.subr.mxu0 0.0
  %1076 = vmatpush1.msra.mxu0 0.0
  %1077 = vmatprep.subr.mxu0 0.0
  %1078 = vmatpush1.msra.mxu0 0.0
  %1079 = vmatprep.subr.mxu0 0.0
  %1080 = vmatpush1.msra.mxu0 0.0
  %1081 = vmatprep.subr.mxu0 0.0
  %1082 = vmatpush1.msra.mxu0 0.0
  %1083 = vmatprep.subr.mxu0 0.0
  %1084 = vmatpush1.msra.mxu0 0.0
  %1085 = vmatprep.subr.mxu0 0.0
  %1086 = vmatpush1.msra.mxu0 0.0
  %1087 = vmatprep.subr.mxu0 0.0
  %1088 = vmatpush1.msra.mxu0 0.0
  %1089 = vmatprep.subr.mxu0 0.0
  %1090 = vmatpush1.msra.mxu0 0.0
  %1091 = vmatprep.subr.mxu0 0.0
  %1092 = vmatpush1.msra.mxu0 0.0
  %1093 = vmatprep.subr.mxu0 0.0
  %1094 = vmatpush1.msra.mxu0 0.0
  %1095 = vmatprep.subr.mxu0 0.0
  %1096 = vmatpush1.msra.mxu0 0.0
  %1097 = vmatprep.mubr.f32.mxu0 0.0
  %v1098 = vand.u32 %v54, 4294901760
  %1099 = vmatmul.mubr.f32.gmra.mrb[0].mxu0 %v1098
  %v1100 = vpop.f32.mrb[0].mxu0
  %v1101 = vadd.f32 %v1000, %v1100
  %v1102 = vpop.f32.mrb[0].mxu0
  %1103 = vdwg.mxu0
  %1104 = vmatprep.subr.mxu0 0.0
  %v1105 = vand.u32 %v46, 4294901760
  %v1106 = vsub.f32 %v46, %v1105
  %1107 = vmatpush1.msra.mxu0 %v1106
  %1108 = vmatprep.subr.mxu0 0.0
  %v1109 = vand.u32 %v47, 4294901760
  %v1110 = vsub.f32 %v47, %v1109
  %1111 = vmatpush1.msra.mxu0 %v1110
  %1112 = vmatprep.subr.mxu0 0.0
  %v1113 = vand.u32 %v48, 4294901760
  %v1114 = vsub.f32 %v48, %v1113
  %1115 = vmatpush1.msra.mxu0 %v1114
  %1116 = vmatprep.subr.mxu0 0.0
  %v1117 = vand.u32 %v49, 4294901760
  %v1118 = vsub.f32 %v49, %v1117
  %1119 = vmatpush1.msra.mxu0 %v1118
  %1120 = vmatprep.subr.mxu0 0.0
  %v1121 = vand.u32 %v50, 4294901760
  %v1122 = vsub.f32 %v50, %v1121
  %1123 = vmatpush1.msra.mxu0 %v1122
  %1124 = vmatprep.subr.mxu0 0.0
  %v1125 = vand.u32 %v58, 4294901760
  %v1126 = vsub.f32 %v58, %v1125
  %1127 = vmatpush1.msra.mxu0 %v1126
  %1128 = vmatprep.subr.mxu0 0.0
  %1129 = vmatpush1.msra.mxu0 0.0
  %1130 = vmatprep.subr.mxu0 0.0
  %1131 = vmatpush1.msra.mxu0 0.0
  %1132 = vmatprep.subr.mxu0 0.0
  %1133 = vmatpush1.msra.mxu0 0.0
  %1134 = vmatprep.subr.mxu0 0.0
  %1135 = vmatpush1.msra.mxu0 0.0
  %1136 = vmatprep.subr.mxu0 0.0
  %1137 = vmatpush1.msra.mxu0 0.0
  %1138 = vmatprep.subr.mxu0 0.0
  %1139 = vmatpush1.msra.mxu0 0.0
  %1140 = vmatprep.subr.mxu0 0.0
  %1141 = vmatpush1.msra.mxu0 0.0
  %1142 = vmatprep.subr.mxu0 0.0
  %1143 = vmatpush1.msra.mxu0 0.0
  %1144 = vmatprep.subr.mxu0 0.0
  %1145 = vmatpush1.msra.mxu0 0.0
  %1146 = vmatprep.subr.mxu0 0.0
  %1147 = vmatpush1.msra.mxu0 0.0
  %1148 = vmatprep.subr.mxu0 0.0
  %1149 = vmatpush1.msra.mxu0 0.0
  %1150 = vmatprep.subr.mxu0 0.0
  %1151 = vmatpush1.msra.mxu0 0.0
  %1152 = vmatprep.subr.mxu0 0.0
  %1153 = vmatpush1.msra.mxu0 0.0
  %1154 = vmatprep.subr.mxu0 0.0
  %1155 = vmatpush1.msra.mxu0 0.0
  %1156 = vmatprep.subr.mxu0 0.0
  %1157 = vmatpush1.msra.mxu0 0.0
  %1158 = vmatprep.subr.mxu0 0.0
  %1159 = vmatpush1.msra.mxu0 0.0
  %1160 = vmatprep.subr.mxu0 0.0
  %1161 = vmatpush1.msra.mxu0 0.0
  %1162 = vmatprep.subr.mxu0 0.0
  %1163 = vmatpush1.msra.mxu0 0.0
  %1164 = vmatprep.subr.mxu0 0.0
  %1165 = vmatpush1.msra.mxu0 0.0
  %1166 = vmatprep.subr.mxu0 0.0
  %1167 = vmatpush1.msra.mxu0 0.0
  %1168 = vmatprep.subr.mxu0 0.0
  %1169 = vmatpush1.msra.mxu0 0.0
  %1170 = vmatprep.subr.mxu0 0.0
  %1171 = vmatpush1.msra.mxu0 0.0
  %1172 = vmatprep.subr.mxu0 0.0
  %1173 = vmatpush1.msra.mxu0 0.0
  %1174 = vmatprep.subr.mxu0 0.0
  %1175 = vmatpush1.msra.mxu0 0.0
  %1176 = vmatprep.subr.mxu0 0.0
  %1177 = vmatpush1.msra.mxu0 0.0
  %1178 = vmatprep.subr.mxu0 0.0
  %1179 = vmatpush1.msra.mxu0 0.0
  %1180 = vmatprep.mubr.f32.mxu0 0.0
  %v1181 = vand.u32 %v54, 4294901760
  %v1182 = vsub.f32 %v54, %v1181
  %1183 = vmatmul.mubr.f32.gmra.mrb[0].mxu0 %v1182
  %v1184 = vpop.f32.mrb[0].mxu0
  %v1185 = vadd.f32 %v1101, %v1184
  %v1186 = vpop.f32.mrb[0].mxu0
  %1187 = vdwg.mxu0
  %1188 = vmatprep.subr.mxu0 0.0
  %v1189 = vand.u32 %v46, 4294901760
  %1190 = vmatpush1.msra.mxu0 %v1189
  %1191 = vmatprep.subr.mxu0 0.0
  %v1192 = vand.u32 %v47, 4294901760
  %1193 = vmatpush1.msra.mxu0 %v1192
  %1194 = vmatprep.subr.mxu0 0.0
  %v1195 = vand.u32 %v48, 4294901760
  %1196 = vmatpush1.msra.mxu0 %v1195
  %1197 = vmatprep.subr.mxu0 0.0
  %v1198 = vand.u32 %v49, 4294901760
  %1199 = vmatpush1.msra.mxu0 %v1198
  %1200 = vmatprep.subr.mxu0 0.0
  %v1201 = vand.u32 %v50, 4294901760
  %1202 = vmatpush1.msra.mxu0 %v1201
  %1203 = vmatprep.subr.mxu0 0.0
  %v1204 = vand.u32 %v58, 4294901760
  %1205 = vmatpush1.msra.mxu0 %v1204
  %1206 = vmatprep.subr.mxu0 0.0
  %1207 = vmatpush1.msra.mxu0 0.0
  %1208 = vmatprep.subr.mxu0 0.0
  %1209 = vmatpush1.msra.mxu0 0.0
  %1210 = vmatprep.subr.mxu0 0.0
  %1211 = vmatpush1.msra.mxu0 0.0
  %1212 = vmatprep.subr.mxu0 0.0
  %1213 = vmatpush1.msra.mxu0 0.0
  %1214 = vmatprep.subr.mxu0 0.0
  %1215 = vmatpush1.msra.mxu0 0.0
  %1216 = vmatprep.subr.mxu0 0.0
  %1217 = vmatpush1.msra.mxu0 0.0
  %1218 = vmatprep.subr.mxu0 0.0
  %1219 = vmatpush1.msra.mxu0 0.0
  %1220 = vmatprep.subr.mxu0 0.0
  %1221 = vmatpush1.msra.mxu0 0.0
  %1222 = vmatprep.subr.mxu0 0.0
  %1223 = vmatpush1.msra.mxu0 0.0
  %1224 = vmatprep.subr.mxu0 0.0
  %1225 = vmatpush1.msra.mxu0 0.0
  %1226 = vmatprep.subr.mxu0 0.0
  %1227 = vmatpush1.msra.mxu0 0.0
  %1228 = vmatprep.subr.mxu0 0.0
  %1229 = vmatpush1.msra.mxu0 0.0
  %1230 = vmatprep.subr.mxu0 0.0
  %1231 = vmatpush1.msra.mxu0 0.0
  %1232 = vmatprep.subr.mxu0 0.0
  %1233 = vmatpush1.msra.mxu0 0.0
  %1234 = vmatprep.subr.mxu0 0.0
  %1235 = vmatpush1.msra.mxu0 0.0
  %1236 = vmatprep.subr.mxu0 0.0
  %1237 = vmatpush1.msra.mxu0 0.0
  %1238 = vmatprep.subr.mxu0 0.0
  %1239 = vmatpush1.msra.mxu0 0.0
  %1240 = vmatprep.subr.mxu0 0.0
  %1241 = vmatpush1.msra.mxu0 0.0
  %1242 = vmatprep.subr.mxu0 0.0
  %1243 = vmatpush1.msra.mxu0 0.0
  %1244 = vmatprep.subr.mxu0 0.0
  %1245 = vmatpush1.msra.mxu0 0.0
  %1246 = vmatprep.subr.mxu0 0.0
  %1247 = vmatpush1.msra.mxu0 0.0
  %1248 = vmatprep.subr.mxu0 0.0
  %1249 = vmatpush1.msra.mxu0 0.0
  %1250 = vmatprep.subr.mxu0 0.0
  %1251 = vmatpush1.msra.mxu0 0.0
  %1252 = vmatprep.subr.mxu0 0.0
  %1253 = vmatpush1.msra.mxu0 0.0
  %1254 = vmatprep.subr.mxu0 0.0
  %1255 = vmatpush1.msra.mxu0 0.0
  %1256 = vmatprep.subr.mxu0 0.0
  %1257 = vmatpush1.msra.mxu0 0.0
  %1258 = vmatprep.mubr.f32.mxu0 0.0
  %v1259 = vand.u32 %v54, 4294901760
  %v1260 = vsub.f32 %v54, %v1259
  %v1261 = vand.u32 %v1260, 4294901760
  %1262 = vmatmul.mubr.f32.gmra.mrb[0].mxu0 %v1261
  %v1263 = vpop.f32.mrb[0].mxu0
  %v1264 = vadd.f32 %v1185, %v1263
  %v1265 = vpop.f32.mrb[0].mxu0
  %1266 = vdwg.mxu0
  %1267 = vmatprep.subr.mxu0 0.0
  %v1268 = vand.u32 %v46, 4294901760
  %v1269 = vsub.f32 %v46, %v1268
  %v1270 = vand.u32 %v1269, 4294901760
  %1271 = vmatpush1.msra.mxu0 %v1270
  %1272 = vmatprep.subr.mxu0 0.0
  %v1273 = vand.u32 %v47, 4294901760
  %v1274 = vsub.f32 %v47, %v1273
  %v1275 = vand.u32 %v1274, 4294901760
  %1276 = vmatpush1.msra.mxu0 %v1275
  %1277 = vmatprep.subr.mxu0 0.0
  %v1278 = vand.u32 %v48, 4294901760
  %v1279 = vsub.f32 %v48, %v1278
  %v1280 = vand.u32 %v1279, 4294901760
  %1281 = vmatpush1.msra.mxu0 %v1280
  %1282 = vmatprep.subr.mxu0 0.0
  %v1283 = vand.u32 %v49, 4294901760
  %v1284 = vsub.f32 %v49, %v1283
  %v1285 = vand.u32 %v1284, 4294901760
  %1286 = vmatpush1.msra.mxu0 %v1285
  %1287 = vmatprep.subr.mxu0 0.0
  %v1288 = vand.u32 %v50, 4294901760
  %v1289 = vsub.f32 %v50, %v1288
  %v1290 = vand.u32 %v1289, 4294901760
  %1291 = vmatpush1.msra.mxu0 %v1290
  %1292 = vmatprep.subr.mxu0 0.0
  %v1293 = vand.u32 %v58, 4294901760
  %v1294 = vsub.f32 %v58, %v1293
  %v1295 = vand.u32 %v1294, 4294901760
  %1296 = vmatpush1.msra.mxu0 %v1295
  %1297 = vmatprep.subr.mxu0 0.0
  %1298 = vmatpush1.msra.mxu0 0.0
  %1299 = vmatprep.subr.mxu0 0.0
  %1300 = vmatpush1.msra.mxu0 0.0
  %1301 = vmatprep.subr.mxu0 0.0
  %1302 = vmatpush1.msra.mxu0 0.0
  %1303 = vmatprep.subr.mxu0 0.0
  %1304 = vmatpush1.msra.mxu0 0.0
  %1305 = vmatprep.subr.mxu0 0.0
  %1306 = vmatpush1.msra.mxu0 0.0
  %1307 = vmatprep.subr.mxu0 0.0
  %1308 = vmatpush1.msra.mxu0 0.0
  %1309 = vmatprep.subr.mxu0 0.0
  %1310 = vmatpush1.msra.mxu0 0.0
  %1311 = vmatprep.subr.mxu0 0.0
  %1312 = vmatpush1.msra.mxu0 0.0
  %1313 = vmatprep.subr.mxu0 0.0
  %1314 = vmatpush1.msra.mxu0 0.0
  %1315 = vmatprep.subr.mxu0 0.0
  %1316 = vmatpush1.msra.mxu0 0.0
  %1317 = vmatprep.subr.mxu0 0.0
  %1318 = vmatpush1.msra.mxu0 0.0
  %1319 = vmatprep.subr.mxu0 0.0
  %1320 = vmatpush1.msra.mxu0 0.0
  %1321 = vmatprep.subr.mxu0 0.0
  %1322 = vmatpush1.msra.mxu0 0.0
  %1323 = vmatprep.subr.mxu0 0.0
  %1324 = vmatpush1.msra.mxu0 0.0
  %1325 = vmatprep.subr.mxu0 0.0
  %1326 = vmatpush1.msra.mxu0 0.0
  %1327 = vmatprep.subr.mxu0 0.0
  %1328 = vmatpush1.msra.mxu0 0.0
  %1329 = vmatprep.subr.mxu0 0.0
  %1330 = vmatpush1.msra.mxu0 0.0
  %1331 = vmatprep.subr.mxu0 0.0
  %1332 = vmatpush1.msra.mxu0 0.0
  %1333 = vmatprep.subr.mxu0 0.0
  %1334 = vmatpush1.msra.mxu0 0.0
  %1335 = vmatprep.subr.mxu0 0.0
  %1336 = vmatpush1.msra.mxu0 0.0
  %1337 = vmatprep.subr.mxu0 0.0
  %1338 = vmatpush1.msra.mxu0 0.0
  %1339 = vmatprep.subr.mxu0 0.0
  %1340 = vmatpush1.msra.mxu0 0.0
  %1341 = vmatprep.subr.mxu0 0.0
  %1342 = vmatpush1.msra.mxu0 0.0
  %1343 = vmatprep.subr.mxu0 0.0
  %1344 = vmatpush1.msra.mxu0 0.0
  %1345 = vmatprep.subr.mxu0 0.0
  %1346 = vmatpush1.msra.mxu0 0.0
  %1347 = vmatprep.subr.mxu0 0.0
  %1348 = vmatpush1.msra.mxu0 0.0
  %1349 = vmatprep.mubr.f32.mxu0 0.0
  %v1350 = vand.u32 %v54, 4294901760
  %1351 = vmatmul.mubr.f32.gmra.mrb[0].mxu0 %v1350
  %v1352 = vpop.f32.mrb[0].mxu0
  %v1353 = vadd.f32 %v1264, %v1352
  %v1354 = vpop.f32.mrb[0].mxu0
  %1355 = vdwg.mxu0
  %1356 = vmatprep.subr.mxu0 0.0
  %v1357 = vand.u32 %v46, 4294901760
  %1358 = vmatpush1.msra.mxu0 %v1357
  %1359 = vmatprep.subr.mxu0 0.0
  %v1360 = vand.u32 %v47, 4294901760
  %1361 = vmatpush1.msra.mxu0 %v1360
  %1362 = vmatprep.subr.mxu0 0.0
  %v1363 = vand.u32 %v48, 4294901760
  %1364 = vmatpush1.msra.mxu0 %v1363
  %1365 = vmatprep.subr.mxu0 0.0
  %v1366 = vand.u32 %v49, 4294901760
  %1367 = vmatpush1.msra.mxu0 %v1366
  %1368 = vmatprep.subr.mxu0 0.0
  %v1369 = vand.u32 %v50, 4294901760
  %1370 = vmatpush1.msra.mxu0 %v1369
  %1371 = vmatprep.subr.mxu0 0.0
  %v1372 = vand.u32 %v58, 4294901760
  %1373 = vmatpush1.msra.mxu0 %v1372
  %1374 = vmatprep.subr.mxu0 0.0
  %1375 = vmatpush1.msra.mxu0 0.0
  %1376 = vmatprep.subr.mxu0 0.0
  %1377 = vmatpush1.msra.mxu0 0.0
  %1378 = vmatprep.subr.mxu0 0.0
  %1379 = vmatpush1.msra.mxu0 0.0
  %1380 = vmatprep.subr.mxu0 0.0
  %1381 = vmatpush1.msra.mxu0 0.0
  %1382 = vmatprep.subr.mxu0 0.0
  %1383 = vmatpush1.msra.mxu0 0.0
  %1384 = vmatprep.subr.mxu0 0.0
  %1385 = vmatpush1.msra.mxu0 0.0
  %1386 = vmatprep.subr.mxu0 0.0
  %1387 = vmatpush1.msra.mxu0 0.0
  %1388 = vmatprep.subr.mxu0 0.0
  %1389 = vmatpush1.msra.mxu0 0.0
  %1390 = vmatprep.subr.mxu0 0.0
  %1391 = vmatpush1.msra.mxu0 0.0
  %1392 = vmatprep.subr.mxu0 0.0
  %1393 = vmatpush1.msra.mxu0 0.0
  %1394 = vmatprep.subr.mxu0 0.0
  %1395 = vmatpush1.msra.mxu0 0.0
  %1396 = vmatprep.subr.mxu0 0.0
  %1397 = vmatpush1.msra.mxu0 0.0
  %1398 = vmatprep.subr.mxu0 0.0
  %1399 = vmatpush1.msra.mxu0 0.0
  %1400 = vmatprep.subr.mxu0 0.0
  %1401 = vmatpush1.msra.mxu0 0.0
  %1402 = vmatprep.subr.mxu0 0.0
  %1403 = vmatpush1.msra.mxu0 0.0
  %1404 = vmatprep.subr.mxu0 0.0
  %1405 = vmatpush1.msra.mxu0 0.0
  %1406 = vmatprep.subr.mxu0 0.0
  %1407 = vmatpush1.msra.mxu0 0.0
  %1408 = vmatprep.subr.mxu0 0.0
  %1409 = vmatpush1.msra.mxu0 0.0
  %1410 = vmatprep.subr.mxu0 0.0
  %1411 = vmatpush1.msra.mxu0 0.0
  %1412 = vmatprep.subr.mxu0 0.0
  %1413 = vmatpush1.msra.mxu0 0.0
  %1414 = vmatprep.subr.mxu0 0.0
  %1415 = vmatpush1.msra.mxu0 0.0
  %1416 = vmatprep.subr.mxu0 0.0
  %1417 = vmatpush1.msra.mxu0 0.0
  %1418 = vmatprep.subr.mxu0 0.0
  %1419 = vmatpush1.msra.mxu0 0.0
  %1420 = vmatprep.subr.mxu0 0.0
  %1421 = vmatpush1.msra.mxu0 0.0
  %1422 = vmatprep.subr.mxu0 0.0
  %1423 = vmatpush1.msra.mxu0 0.0
  %1424 = vmatprep.subr.mxu0 0.0
  %1425 = vmatpush1.msra.mxu0 0.0
  %1426 = vmatprep.mubr.f32.mxu0 0.0
  %v1427 = vand.u32 %v54, 4294901760
  %1428 = vmatmul.mubr.f32.gmra.mrb[0].mxu0 %v1427
  %v1429 = vpop.f32.mrb[0].mxu0
  %v1430 = vadd.f32 %v1353, %v1429
  %v1431 = vpop.f32.mrb[0].mxu0
  %1432 = vdwg.mxu0
  %vm1433 = vcmask 31744
  %v1434 = vsel %vm1433, %v1430, -inf
  %1435 = vmax.xlane.f32.xlu0 %v1434
  %v1436 = vpop.xlane.xlu0 %1435
  %v1437 = vsub.f32 %v1430, %v1436
  %v1438 = vmul.f32 %v1437, 1.442695
  %v1439 = vpow.pop %v1438
  %v1440 = vsel %vm1433, %v1439, 0.0
  %1441 = vadd.xlane.f32.xlu0 %v1440
  %v1442 = vpop.xlane.xlu0 %1441
  %v1443 = vrcp.pop %v1442
  %v1444 = vmul.f32 %v1439, %v1443
  %1445 = vst.msk [vmem:[%s2] sm:$0xff] %vm1433, %v1444
  // Predicated region
  $region10: #{linear_softmax.1} parent=0 // pred_check
    _
  $region11: #{linear_softmax.1} parent=0 // pred_check_branch
    %1447 = sbr.rel (0) target = $region13
  $region12: #{linear_softmax.1} parent=0 // pred_region
    _
  $region13: #{linear_softmax.1} parent=0 // pred_fallthru
    _
  // Predicated region
  $region14: #{linear_softmax.1} parent=0 // pred_check
    _
  $region15: #{linear_softmax.1} parent=0 // pred_check_branch
    %1449 = sbr.rel (0) target = $region17
  $region16: #{linear_softmax.1} parent=0 // pred_region
    _
  $region17: #{linear_softmax.1} parent=0 // pred_fallthru
    _

</llo_original>
